<compile_context>
chip_gen: v7x
topology: tpu7x:2x2x1
jax: 0.10.0
libtpu: 0.0.40
codegen_flags: <defaults>
</compile_context>

<pallas_src>
import functools

import jax
import jax.numpy as jnp
from jax import lax
from jax.experimental import pallas as pl
from jax.experimental.pallas import tpu as pltpu


def attention_kernel(e_ref, q_ref, m_ref, wt_ref, b_ref, attn_ref, coeff_ref,
                     *, approx_recip: bool):
    """One batch block per grid step; every contraction is a single (batched) MXU call."""
    Bb, T, D = e_ref.shape
    Dh = q_ref.shape[1]
    mm_dtype = q_ref.dtype          # MXU-input dtype (f32 or bf16); accumulation stays f32

    # ---- Fused linear projection over the whole batch block (self.fc on all words) ----
    #      [Bb*T, D] @ [D, Dh] + bias -> [Bb*T, Dh]
    ev = e_ref[...].reshape(Bb * T, D)
    values_f32 = jnp.dot(ev, wt_ref[...], preferred_element_type=jnp.float32) + b_ref[...]
    values = values_f32.reshape(Bb, T, Dh).astype(mm_dtype)        # [Bb, T, Dh]

    # ---- S[b, t, n] = sum_d values[b, t, d] * q[b, d, n]  (one batched dot_general) ----
    s = lax.dot_general(values, q_ref[...],
                        dimension_numbers=(((2,), (1,)), ((0,), (0,))),
                        preferred_element_type=jnp.float32)        # [Bb, T, Np]

    # masked_fill_(mask, -inf); mask [Bb, T, 1] broadcasts over N (computed once per block).
    s = jnp.where(m_ref[...] != 0, -jnp.inf, s)

    # exp-normalize over the token axis (no max subtraction, faithful to the reference;
    # an all-masked column gives 0/0 = NaN exactly like the PyTorch code).
    s_exp = jnp.exp(s)
    denom = jnp.sum(s_exp, axis=1, keepdims=True)                  # [Bb, 1, Np]
    if approx_recip:
        coeff = s_exp * pl.reciprocal(denom, approx=True)          # EUP slot, co-issues free
    else:
        coeff = s_exp / denom                                      # exact path (f32 fidelity)
    coeff_ref[...] = coeff.astype(coeff_ref.dtype)                 # lane-dense full-width store

    # ---- attn[b, d, n] = sum_t values[b, t, d] * coeff[b, t, n]  (batched dot_general) --
    attn = lax.dot_general(values, coeff.astype(mm_dtype),
                           dimension_numbers=(((1,), (1,)), ((0,), (0,))),
                           preferred_element_type=jnp.float32)     # [Bb, Dh, Np]
    attn_ref[...] = attn.astype(attn_ref.dtype)


def _tpu_hw_info():
    """Best-effort (vmem_capacity_bytes, tensorcores_per_chip); safe fallbacks everywhere."""
    num_tc = 1
    vmem_cap = None
    try:
        kind = (jax.devices()[0].device_kind or "").lower()
    except Exception:
        kind = ""
    if "v7" in kind or "7x" in kind:
        num_tc = 2                  # v7x: 2 TensorCores per chip, 64 MiB VMEM per TC
        vmem_cap = 64 << 20
    try:
        cap = getattr(pltpu.get_tpu_info(), "vmem_capacity_bytes", None)
        if cap:
            vmem_cap = int(cap)
    except Exception:
        pass
    if vmem_cap is None:
        vmem_cap = 128 << 20        # v5e / v6e physical VMEM
    return vmem_cap, num_tc


def _pick_batch_block(B, T, D, Dh, Np, mm_itemsize, out_itemsize, vmem_budget, num_tc,
                      requested=None):
    """Largest batch block that (a) divides B, (b) fits the VMEM budget counting the
    double-buffered I/O tiles, the resident W^T/bias and the in-kernel f32 temporaries,
    and (c) on multi-TC chips leaves a step count both TensorCores can share."""
    in_bytes = mm_itemsize * (T * D + Dh * Np) + 4 * T                  # e, q, mask
    out_bytes = out_itemsize * (T * Np + Dh * Np)                       # coeff, attn tiles
    tmp_bytes = (4 * (T * Dh + 3 * T * Np + Dh * Np + Np)               # f32 values/S/exp/coeff/attn/denom
                 + mm_itemsize * (T * Dh + T * Np))                     # casts fed to the MXU
    per_sample = 2 * (in_bytes + out_bytes) + tmp_bytes                 # x2: double-buffered I/O
    resident = 2 * (mm_itemsize * D * Dh + 4 * Dh)                      # W^T + bias

    if requested is not None:
        bb = max(1, min(int(requested), B))
        while B % bb:
            bb -= 1
        return bb, per_sample, resident

    bb = int(max(1, min(B, (vmem_budget - resident) // max(per_sample, 1))))
    if num_tc > 1 and B >= num_tc:
        bb = min(bb, B // num_tc)           # >= num_tc grid steps so every TC gets work
        cand = bb
        while cand >= 1:                    # prefer a step count divisible by num_tc
            if B % cand == 0 and (B // cand) % num_tc == 0:
                return cand, per_sample, resident
            cand -= 1
    while B % bb:
        bb -= 1
    return bb, per_sample, resident


def attention_forward(word_features, image_features, words_mask, weight, bias, *,
                      batch_block=None, matmul_dtype=jnp.bfloat16, out_dtype=jnp.float32,
                      approx_reciprocal=None, return_coefficients_tn=False):
    """
    word_features:  [B, D, T] float32     (e)
    image_features: [B, Dh, H, W] float32 (h)
    words_mask:     [B, T] int/bool (nonzero => mask token out)
    weight:         [Dh, D] (nn.Linear weight), bias: [Dh]
    matmul_dtype:   MXU-input dtype; bf16 default halves input DMA, accumulation stays f32.
    out_dtype:      dtype of the outputs (f32 default = module semantics; bf16 halves writeback).
    returns (attn [B, Dh, N], attn_coefficients [B, N, T])
            (or coefficients in [B, T, N] if return_coefficients_tn=True, skipping the transpose)
    """
    B, D, T = word_features.shape
    Dh, H, W = image_features.shape[1], image_features.shape[2], image_features.shape[3]
    N = H * W
    Np = pl.cdiv(N, 128) * 128          # lane-dense last dim: unmasked full-width stores
    if approx_reciprocal is None:
        approx_reciprocal = (jnp.dtype(matmul_dtype) != jnp.dtype(jnp.float32))

    # Small tensor: one cheap transpose buys the single fused [Bb*T, D] projection matmul.
    e = jnp.transpose(word_features, (0, 2, 1)).astype(matmul_dtype)   # [B, T, D]
    # Big tensor: native layout, free reshape; zero-pad the N axis up to the lane width.
    q = image_features.reshape(B, Dh, N).astype(matmul_dtype)          # [B, Dh, N]
    if Np != N:
        q = jnp.pad(q, ((0, 0), (0, 0), (0, Np - N)))
    m = words_mask.reshape(B, T, 1).astype(jnp.int32)                  # [B, T, 1]
    wt = jnp.transpose(weight, (1, 0)).astype(matmul_dtype)            # [D, Dh]
    bvec = bias.reshape(1, Dh).astype(jnp.float32)                     # [1, Dh]

    vmem_cap, num_tc = _tpu_hw_info()
    vmem_budget = min(vmem_cap // 3, 32 << 20)     # ~21 MiB on v7x (64 MiB VMEM), 32 MiB on v5e/v6e
    mm_isz = jnp.dtype(matmul_dtype).itemsize
    out_isz = jnp.dtype(out_dtype).itemsize
    Bb, per_sample, resident = _pick_batch_block(
        B, T, D, Dh, Np, mm_isz, out_isz, vmem_budget, num_tc, batch_block)
    vmem_limit = int(min(vmem_cap * 3 // 4,
                         max(resident + Bb * per_sample + (4 << 20), 32 << 20)))

    grid_spec = pltpu.PrefetchScalarGridSpec(
        num_scalar_prefetch=0,
        grid=(B // Bb,),
        in_specs=[
            pl.BlockSpec((Bb, T, D), lambda i: (i, 0, 0)),    # e
            pl.BlockSpec((Bb, Dh, Np), lambda i: (i, 0, 0)),  # q (native layout, padded N)
            pl.BlockSpec((Bb, T, 1), lambda i: (i, 0, 0)),    # mask
            pl.BlockSpec((D, Dh), lambda i: (0, 0)),          # W^T, resident across the grid
            pl.BlockSpec((1, Dh), lambda i: (0, 0)),          # bias, resident across the grid
        ],
        out_specs=[
            pl.BlockSpec((Bb, Dh, Np), lambda i: (i, 0, 0)),  # attn     [B, Dh, Np]
            pl.BlockSpec((Bb, T, Np), lambda i: (i, 0, 0)),   # coeff_tn [B, T, Np]
        ],
    )

    attn_p, coeff_p = pl.pallas_call(
        functools.partial(attention_kernel, approx_recip=bool(approx_reciprocal)),
        out_shape=(
            jax.ShapeDtypeStruct((B, Dh, Np), out_dtype),
            jax.ShapeDtypeStruct((B, T, Np), out_dtype),
        ),
        grid_spec=grid_spec,
        compiler_params=pltpu.CompilerParams(
            dimension_semantics=("parallel",),
            vmem_limit_bytes=vmem_limit),
    )(e, q, m, wt, bvec)

    attn = attn_p[:, :, :N] if Np != N else attn_p
    coeff_tn = coeff_p[:, :, :N] if Np != N else coeff_p
    if return_coefficients_tn:
        return attn, coeff_tn
    # Present the coefficients in the PyTorch return layout [B, N, T].
    return attn, jnp.transpose(coeff_tn, (0, 2, 1))


def attention_reference(word_features, image_features, words_mask, weight, bias):
    """Pure-JAX reference mirroring the PyTorch forward exactly."""
    B, D, T = word_features.shape
    Dh, H, W = image_features.shape[1], image_features.shape[2], image_features.shape[3]
    N = H * W
    values = jnp.einsum('bdt,od->bot', word_features, weight) + bias[None, :, None]  # [B, Dh, T]
    queries = jnp.transpose(image_features.reshape(B, Dh, N), (0, 2, 1))             # [B, N, Dh]
    S = jnp.einsum('bnd,bdt->bnt', queries, values)                                  # [B, N, T]
    S = jnp.where(words_mask[:, None, :] != 0, -jnp.inf, S)
    S_exp = jnp.exp(S)
    coeff = S_exp / jnp.sum(S_exp, axis=2, keepdims=True)
    attn = jnp.einsum('bdt,bnt->bdn', values, coeff)
    return attn, coeff


if __name__ == "__main__":
    # Small shapes consistent with the module's forward.
    B = 4
    D = 32      # word_feature_dim
    Dh = 16     # image_feature_dim
    H = W = 8   # spatial -> N = 64
    T = 8       # seq_len
    N = H * W

    key = jax.random.PRNGKey(0)
    k1, k2, k3, k4 = jax.random.split(key, 4)

    word_features = jax.random.normal(k1, (B, D, T), dtype=jnp.float32)
    image_features = jax.random.normal(k2, (B, Dh, H, W), dtype=jnp.float32)
    # Deterministic mask: 1 marks positions to mask out; every row keeps >= 1 token.
    lengths = jnp.array([8, 5, 3, 6], dtype=jnp.int32)
    words_mask = (jnp.arange(T)[None, :] >= lengths[:, None]).astype(jnp.int32)

    # Deterministic nn.Linear(D, Dh) parameters.
    weight = jax.random.normal(k3, (Dh, D), dtype=jnp.float32) * 0.05
    bias = jax.random.normal(k4, (Dh,), dtype=jnp.float32) * 0.05

    attn_ref, coeff_ref = attention_reference(word_features, image_features, words_mask,
                                              weight, bias)

    # Default production path: bf16 MXU inputs, f32 outputs, auto-sized batch block,
    # approx reciprocal on the EUP.
    attn, coeff = attention_forward(word_features, image_features, words_mask, weight, bias)
    jax.block_until_ready((attn, coeff))
    assert attn.shape == (B, Dh, N)
    assert coeff.shape == (B, N, T)
    assert jnp.allclose(attn, attn_ref, atol=5e-2, rtol=5e-2)
    assert jnp.allclose(coeff, coeff_ref, atol=2e-2, rtol=2e-2)

    # Exact f32 path with an explicit 2-sample batch block (exercises a multi-step grid
    # and the exact-division softmax); tight tolerances against the reference.
    attn32, coeff32 = attention_forward(word_features, image_features, words_mask, weight, bias,
                                        matmul_dtype=jnp.float32, batch_block=2)
    jax.block_until_ready((attn32, coeff32))
    assert jnp.allclose(attn32, attn_ref, atol=1e-4, rtol=1e-4)
    assert jnp.allclose(coeff32, coeff_ref, atol=1e-5, rtol=1e-5)

    print("KERNEL_OK")
</pallas_src>

<mosaic_0001>
module attributes {stable_mosaic.version = 11 : i64} {
  func.func @attention_kernel(%arg0: i32, %arg1: memref<4x8x32xbf16, #tpu.memory_space<vmem>>, %arg2: memref<4x16x128xbf16, #tpu.memory_space<vmem>>, %arg3: memref<4x8x1xi32, #tpu.memory_space<vmem>>, %arg4: memref<32x16xbf16, #tpu.memory_space<vmem>>, %arg5: memref<1x16xf32, #tpu.memory_space<vmem>>, %arg6: memref<4x16x128xf32, #tpu.memory_space<vmem>>, %arg7: memref<4x8x128xf32, #tpu.memory_space<vmem>>) attributes {dimension_semantics = [#tpu.dimension_semantics<parallel>], iteration_bounds = array<i64: 1>, scalar_prefetch = 0 : i64, scratch_operands = 0 : i64, tpu.core_type = #tpu.core_type<tc>, window_params = [{transform_indices = @transform_0, window_bounds = array<i64: 4, 8, 32>}, {transform_indices = @transform_1, window_bounds = array<i64: 4, 16, 128>}, {transform_indices = @transform_2, window_bounds = array<i64: 4, 8, 1>}, {pipeline_mode = #tpu.pipeline_mode<synchronous>, transform_indices = @transform_3, window_bounds = array<i64: 32, 16>}, {pipeline_mode = #tpu.pipeline_mode<synchronous>, transform_indices = @transform_4, window_bounds = array<i64: 1, 16>}, {transform_indices = @transform_5, window_bounds = array<i64: 4, 16, 128>}, {transform_indices = @transform_6, window_bounds = array<i64: 4, 8, 128>}]} {
    %c0 = arith.constant 0 : index
    %c0_0 = arith.constant 0 : index
    %c0_1 = arith.constant 0 : index
    %0 = vector.load %arg1[%c0, %c0_0, %c0_1] : memref<4x8x32xbf16, #tpu.memory_space<vmem>>, vector<4x8x32xbf16>
    %1 = vector.shape_cast %0 : vector<4x8x32xbf16> to vector<32x32xbf16>
    %c0_2 = arith.constant 0 : index
    %c0_3 = arith.constant 0 : index
    %2 = vector.load %arg4[%c0_2, %c0_3] : memref<32x16xbf16, #tpu.memory_space<vmem>>, vector<32x16xbf16>
    %cst = arith.constant dense<0.000000e+00> : vector<32x16xf32>
    %3 = tpu.matmul %1, %2, %cst {dimension_numbers = #tpu.dot_dimension_numbers<[1], [0], [0], [1], [0, 0, 1, 1], [], []>} : vector<32x32xbf16>, vector<32x16xbf16>, vector<32x16xf32> -> vector<32x16xf32>
    %c0_4 = arith.constant 0 : index
    %c0_5 = arith.constant 0 : index
    %4 = vector.load %arg5[%c0_4, %c0_5] : memref<1x16xf32, #tpu.memory_space<vmem>>, vector<1x16xf32>
    %5 = vector.broadcast %4 : vector<1x16xf32> to vector<32x16xf32>
    %6 = arith.addf %3, %5 : vector<32x16xf32>
    %7 = vector.shape_cast %6 : vector<32x16xf32> to vector<4x8x16xf32>
    %8 = arith.truncf %7 : vector<4x8x16xf32> to vector<4x8x16xbf16>
    %c0_6 = arith.constant 0 : index
    %c0_7 = arith.constant 0 : index
    %c0_8 = arith.constant 0 : index
    %9 = vector.load %arg2[%c0_6, %c0_7, %c0_8] : memref<4x16x128xbf16, #tpu.memory_space<vmem>>, vector<4x16x128xbf16>
    %cst_9 = arith.constant dense<0.000000e+00> : vector<4x8x128xf32>
    %10 = tpu.matmul %8, %9, %cst_9 {dimension_numbers = #tpu.dot_dimension_numbers<[2], [1], [1], [2], [0, 0, 0, 1, 1, 2], [0], [0]>} : vector<4x8x16xbf16>, vector<4x16x128xbf16>, vector<4x8x128xf32> -> vector<4x8x128xf32>
    %c0_10 = arith.constant 0 : index
    %c0_11 = arith.constant 0 : index
    %c0_12 = arith.constant 0 : index
    %11 = vector.load %arg3[%c0_10, %c0_11, %c0_12] : memref<4x8x1xi32, #tpu.memory_space<vmem>>, vector<4x8x1xi32>
    %c0_i32 = arith.constant 0 : i32
    %12 = vector.broadcast %c0_i32 : i32 to vector<4x8x1xi32>
    %13 = arith.cmpi ne, %11, %12 : vector<4x8x1xi32>
    %cst_13 = arith.constant 0xFF800000 : f32
    %14 = vector.shape_cast %13 : vector<4x8x1xi1> to vector<4x8x1xi1>
    %15 = vector.broadcast %14 : vector<4x8x1xi1> to vector<4x8x128xi1>
    %16 = vector.broadcast %cst_13 : f32 to vector<4x8x128xf32>
    %17 = arith.select %15, %16, %10 : vector<4x8x128xi1>, vector<4x8x128xf32>
    %18 = math.exp %17 : vector<4x8x128xf32>
    %cst_14 = arith.constant dense<0.000000e+00> : vector<4x128xf32>
    %19 = vector.multi_reduction <add>, %18, %cst_14 [1] : vector<4x8x128xf32> to vector<4x128xf32>
    %20 = vector.shape_cast %19 : vector<4x128xf32> to vector<4x1x128xf32>
    %21 = tpu.reciprocal %20 {approx = true} : vector<4x1x128xf32> -> vector<4x1x128xf32>
    %22 = vector.broadcast %21 : vector<4x1x128xf32> to vector<4x8x128xf32>
    %23 = arith.mulf %18, %22 : vector<4x8x128xf32>
    %c0_15 = arith.constant 0 : index
    %c0_16 = arith.constant 0 : index
    %c0_17 = arith.constant 0 : index
    %24 = vector.load %arg7[%c0_15, %c0_16, %c0_17] : memref<4x8x128xf32, #tpu.memory_space<vmem>>, vector<4x8x128xf32>
    tpu.vector_store %arg7[%c0_15, %c0_16, %c0_17], %23 {strides = array<i32>} : memref<4x8x128xf32, #tpu.memory_space<vmem>>, vector<4x8x128xf32>,
    %25 = arith.truncf %23 : vector<4x8x128xf32> to vector<4x8x128xbf16>
    %cst_18 = arith.constant dense<0.000000e+00> : vector<4x16x128xf32>
    %26 = tpu.matmul %8, %25, %cst_18 {dimension_numbers = #tpu.dot_dimension_numbers<[1], [1], [2], [2], [0, 0, 0, 2, 1, 2], [0], [0]>} : vector<4x8x16xbf16>, vector<4x8x128xbf16>, vector<4x16x128xf32> -> vector<4x16x128xf32>
    %c0_19 = arith.constant 0 : index
    %c0_20 = arith.constant 0 : index
    %c0_21 = arith.constant 0 : index
    %27 = vector.load %arg6[%c0_19, %c0_20, %c0_21] : memref<4x16x128xf32, #tpu.memory_space<vmem>>, vector<4x16x128xf32>
    tpu.vector_store %arg6[%c0_19, %c0_20, %c0_21], %26 {strides = array<i32>} : memref<4x16x128xf32, #tpu.memory_space<vmem>>, vector<4x16x128xf32>,
    return
  }
  func.func @transform_0(%arg0: i32) -> (i32, i32, i32) {
    %c0_i32 = arith.constant 0 : i32
    %c0_i32_0 = arith.constant 0 : i32
    %c0_i32_1 = arith.constant 0 : i32
    return %arg0, %c0_i32, %c0_i32_0 : i32, i32, i32
  }
  func.func @transform_1(%arg0: i32) -> (i32, i32, i32) {
    %c0_i32 = arith.constant 0 : i32
    %c0_i32_0 = arith.constant 0 : i32
    %c0_i32_1 = arith.constant 0 : i32
    return %arg0, %c0_i32, %c0_i32_0 : i32, i32, i32
  }
  func.func @transform_2(%arg0: i32) -> (i32, i32, i32) {
    %c0_i32 = arith.constant 0 : i32
    %c0_i32_0 = arith.constant 0 : i32
    %c0_i32_1 = arith.constant 0 : i32
    return %arg0, %c0_i32, %c0_i32_0 : i32, i32, i32
  }
  func.func @transform_3(%arg0: i32) -> (i32, i32) {
    %c0_i32 = arith.constant 0 : i32
    %c0_i32_0 = arith.constant 0 : i32
    %c0_i32_1 = arith.constant 0 : i32
    return %c0_i32, %c0_i32_0 : i32, i32
  }
  func.func @transform_4(%arg0: i32) -> (i32, i32) {
    %c0_i32 = arith.constant 0 : i32
    %c0_i32_0 = arith.constant 0 : i32
    %c0_i32_1 = arith.constant 0 : i32
    return %c0_i32, %c0_i32_0 : i32, i32
  }
  func.func @transform_5(%arg0: i32) -> (i32, i32, i32) {
    %c0_i32 = arith.constant 0 : i32
    %c0_i32_0 = arith.constant 0 : i32
    %c0_i32_1 = arith.constant 0 : i32
    return %arg0, %c0_i32, %c0_i32_0 : i32, i32, i32
  }
  func.func @transform_6(%arg0: i32) -> (i32, i32, i32) {
    %c0_i32 = arith.constant 0 : i32
    %c0_i32_0 = arith.constant 0 : i32
    %c0_i32_1 = arith.constant 0 : i32
    return %arg0, %c0_i32, %c0_i32_0 : i32, i32, i32
  }
}

</mosaic_0001>

<llo_original>
// kernel: tpu_custom_call.1
$region0: #{tpu_custom_call.1}
  #allocation0 [shape = 'u32[]', space=smem, size = 0x4, offset = 0x4, fixed_abs, tag = 'smem constant byte address 0x4 - core index']
  #allocation1 [shape = 'u32[144,128]{1,0:T(1,128)}', space=vmem, size = 0x12000, scoped, tag = 'internal scratch']
  %s0 = inlined_call_operand.vmem [shape: bf16[4,8,32], index: 0, kind: input, shape index: {}]
  %s1 = inlined_call_operand.vmem [shape: bf16[4,16,128], index: 1, kind: input, shape index: {}]
  %s2 = inlined_call_operand.vmem [shape: s32[4,8,1], index: 2, kind: input, shape index: {}]
  %s3 = inlined_call_operand.vmem [shape: bf16[32,16], index: 3, kind: input, shape index: {}]
  %s4 = inlined_call_operand.vmem [shape: f32[1,16], index: 4, kind: input, shape index: {}]
  %s5 = inlined_call_operand.hbm [shape: f32[4,16,128], index: 5, kind: output, shape index: {0}]
  %s6 = inlined_call_operand.hbm [shape: f32[4,8,128], index: 6, kind: output, shape index: {1}]
  %7 = xla_tuple %s5, %s6
  %s8 = sld [smem:[#allocation0]]
  $region38: #{tpu_custom_call.1} parent=0
    _
  %s10 = ssub.s32 1, %s8
  %s11 = scalar_select 0, %s10, %s8
  $region1: #{tpu_custom_call.1} parent=0
    #allocation2 [shape = 'u8[32768]{0}', space=vmem, size = 0x8000, scoped, tag = 'output window, operand 0, single buffered']
    #allocation3 [shape = 's32[1]{0}', space=sflag, size = 0x4, scoped, tag = 'scoped memory for tpu_custom_call.1']
    #allocation4 [shape = 'u8[16384]{0}', space=vmem, size = 0x4000, scoped, tag = 'output window, operand 1, single buffered']
    #allocation5 [shape = 's32[1]{0}', space=sflag, size = 0x4, scoped, tag = 'scoped memory for tpu_custom_call.1']
    %12 = vsyncpa [#allocation3], 0
    %13 = vsyncpa [#allocation5], 0
    // Predicated region
    $region2: #{tpu_custom_call.1} parent=1 // pred_check
      _
    $region3: #{tpu_custom_call.1} parent=1 // pred_check_branch
      %15 = sbr.rel (0) target = $region5
    $region4: #{tpu_custom_call.1} parent=1 // pred_region
      _
    $region5: #{tpu_custom_call.1} parent=1 // pred_fallthru
      _
    // Predicated region
    $region6: #{tpu_custom_call.1} parent=1 // pred_check
      _
    $region7: #{tpu_custom_call.1} parent=1 // pred_check_branch
      %17 = sbr.rel (0) target = $region9
    $region8: #{tpu_custom_call.1} parent=1 // pred_region
      _
    $region9: #{tpu_custom_call.1} parent=1 // pred_fallthru
      _
    // Predicated region
    $region10: #{tpu_custom_call.1} parent=1 // pred_check
      _
    $region11: #{tpu_custom_call.1} parent=1 // pred_check_branch
      %19 = sbr.rel (0) target = $region13
    $region12: #{tpu_custom_call.1} parent=1 // pred_region
      _
    $region13: #{tpu_custom_call.1} parent=1 // pred_fallthru
      _
    // Predicated region
    $region14: #{tpu_custom_call.1} parent=1 // pred_check
      _
    $region15: #{tpu_custom_call.1} parent=1 // pred_check_branch
      %21 = sbr.rel (0) target = $region17
    $region16: #{tpu_custom_call.1} parent=1 // pred_region
      _
    $region17: #{tpu_custom_call.1} parent=1 // pred_fallthru
      _
    // Predicated region
    $region18: #{tpu_custom_call.1} parent=1 // pred_check
      _
    $region19: #{tpu_custom_call.1} parent=1 // pred_check_branch
      %23 = sbr.rel (0) target = $region21
    $region20: #{tpu_custom_call.1} parent=1 // pred_region
      _
    $region21: #{tpu_custom_call.1} parent=1 // pred_fallthru
      _
    %v25 = vld [vmem:[%s0] sm:$0xf]
    %v26 = vld [vmem:[%s0 + $0x4] sm:$0xf]
    %v27 = vld [vmem:[%s0 + $0x8] sm:$0xf]
    %v28 = vld [vmem:[%s0 + $0xc] sm:$0xf]
    %v29 = vld [vmem:[%s3] sm:$0xf]
    %v30 = vld [vmem:[%s3 + $0x4] sm:$0xf]
    %v31 = vld [vmem:[%s3 + $0x8] sm:$0xf]
    %v32 = vld [vmem:[%s3 + $0xc] sm:$0xf]
    %v33 = vld [vmem:[%s4] sm:$0x1]
    %v35 = vlaneseq
    %v36 = vshrl.u32 %v35, 7
    %v37 = vsub.s32 0, %v36
    %v38 = vrot.slane %v33, %v37
    %v44 = vunpack.c.l.b16 %v25
    %v45 = vunpack.c.l.b16 %v26
    %v46 = vunpack.c.l.b16 %v27
    %v47 = vunpack.c.l.b16 %v28
    %v48 = vpack.c.b16 %v45, %v44
    %v49 = vpack.c.b16 %v47, %v46
    %v54 = vunpack.c.l.b16 %v29
    %v55 = vunpack.c.l.b16 %v30
    %v56 = vunpack.c.l.b16 %v31
    %v57 = vunpack.c.l.b16 %v32
    %v58 = vpack.c.b16 %v55, %v54
    %v59 = vpack.c.b16 %v57, %v56
    %vm62 = vcmask 261120
    %v64 = vsel %vm62, %v48, 0
    %v67 = vsel %vm62, %v49, 0
    %69 = vmatprep.subr.bf16.mxu0 0
    %70 = vmatpush1.bf16.msra.mxu0 %v58
    %71 = vmatprep.subr.bf16.mxu0 0
    %72 = vmatpush1.bf16.msra.mxu0 %v59
    %73 = vmatprep.subr.bf16.mxu0 0
    %74 = vmatpush1.bf16.msra.mxu0 0
    %75 = vmatprep.subr.bf16.mxu0 0
    %76 = vmatpush1.bf16.msra.mxu0 0
    %77 = vmatprep.subr.bf16.mxu0 0
    %78 = vmatpush1.bf16.msra.mxu0 0
    %79 = vmatprep.subr.bf16.mxu0 0
    %80 = vmatpush1.bf16.msra.mxu0 0
    %81 = vmatprep.subr.bf16.mxu0 0
    %82 = vmatpush1.bf16.msra.mxu0 0
    %83 = vmatprep.subr.bf16.mxu0 0
    %84 = vmatpush1.bf16.msra.mxu0 0
    %85 = vmatprep.subr.bf16.mxu0 0
    %86 = vmatpush1.bf16.msra.mxu0 0
    %87 = vmatprep.subr.bf16.mxu0 0
    %88 = vmatpush1.bf16.msra.mxu0 0
    %89 = vmatprep.subr.bf16.mxu0 0
    %90 = vmatpush1.bf16.msra.mxu0 0
    %91 = vmatprep.subr.bf16.mxu0 0
    %92 = vmatpush1.bf16.msra.mxu0 0
    %93 = vmatprep.subr.bf16.mxu0 0
    %94 = vmatpush1.bf16.msra.mxu0 0
    %95 = vmatprep.subr.bf16.mxu0 0
    %96 = vmatpush1.bf16.msra.mxu0 0
    %97 = vmatprep.subr.bf16.mxu0 0
    %98 = vmatpush1.bf16.msra.mxu0 0
    %99 = vmatprep.subr.bf16.mxu0 0
    %100 = vmatpush1.bf16.msra.mxu0 0
    %101 = vmatprep.mubr.bf16.mxu0 0
    %102 = vmatmul.mubr.bf16.gmra.mrb[0].mxu0 %v64
    %v103 = vpop.f32.mrb[0].mxu0
    %v104 = vadd.f32 %v38, %v103
    %v105 = vpop.f32.mrb[0].mxu0
    %v106 = vpop.f32.mrb[0].mxu0
    %v107 = vadd.f32 %v38, %v106
    %v108 = vpop.f32.mrb[0].mxu0
    %109 = vmatprep.mubr.bf16.mxu0 0
    %110 = vmatmul.mubr.bf16.gmra.mrb[0].mxu0 %v67
    %v111 = vpop.f32.mrb[0].mxu0
    %v112 = vadd.f32 %v38, %v111
    %v113 = vpop.f32.mrb[0].mxu0
    %v114 = vpop.f32.mrb[0].mxu0
    %v115 = vadd.f32 %v38, %v114
    %v116 = vpop.f32.mrb[0].mxu0
    %117 = vdwg.mxu0
    %v118 = vpack.c.bf16 %v104, %v104
    %v119 = vpack.c.bf16 %v107, %v107
    %v120 = vpack.c.bf16 %v112, %v112
    %v121 = vpack.c.bf16 %v115, %v115
    %v122 = vld [vmem:[%s1] sm:$0xf]
    %v123 = vld [vmem:[%s1 + $0x4] sm:$0xf]
    %v124 = vld [vmem:[%s1 + $0x8] sm:$0xf]
    %v125 = vld [vmem:[%s1 + $0xc] sm:$0xf]
    %v126 = vld [vmem:[%s1 + $0x10] sm:$0xf]
    %v127 = vld [vmem:[%s1 + $0x14] sm:$0xf]
    %v128 = vld [vmem:[%s1 + $0x18] sm:$0xf]
    %v129 = vld [vmem:[%s1 + $0x1c] sm:$0xf]
    %v132 = vunpack.c.l.b16 %v122
    %v133 = vunpack.c.l.b16 %v123
    %v134 = vpack.c.b16 %v133, %v132
    %vm136 = vcmask 130048
    %v138 = vsel %vm136, %v118, 0
    %140 = vmatprep.subr.bf16.mxu0 0
    %141 = vmatpush1.bf16.msra.mxu0 %v134
    %142 = vmatprep.subr.bf16.mxu0 0
    %143 = vmatpush1.bf16.msra.mxu0 0
    %144 = vmatprep.subr.bf16.mxu0 0
    %145 = vmatpush1.bf16.msra.mxu0 0
    %146 = vmatprep.subr.bf16.mxu0 0
    %147 = vmatpush1.bf16.msra.mxu0 0
    %148 = vmatprep.subr.bf16.mxu0 0
    %149 = vmatpush1.bf16.msra.mxu0 0
    %150 = vmatprep.subr.bf16.mxu0 0
    %151 = vmatpush1.bf16.msra.mxu0 0
    %152 = vmatprep.subr.bf16.mxu0 0
    %153 = vmatpush1.bf16.msra.mxu0 0
    %154 = vmatprep.subr.bf16.mxu0 0
    %155 = vmatpush1.bf16.msra.mxu0 0
    %156 = vmatprep.subr.bf16.mxu0 0
    %157 = vmatpush1.bf16.msra.mxu0 0
    %158 = vmatprep.subr.bf16.mxu0 0
    %159 = vmatpush1.bf16.msra.mxu0 0
    %160 = vmatprep.subr.bf16.mxu0 0
    %161 = vmatpush1.bf16.msra.mxu0 0
    %162 = vmatprep.subr.bf16.mxu0 0
    %163 = vmatpush1.bf16.msra.mxu0 0
    %164 = vmatprep.subr.bf16.mxu0 0
    %165 = vmatpush1.bf16.msra.mxu0 0
    %166 = vmatprep.subr.bf16.mxu0 0
    %167 = vmatpush1.bf16.msra.mxu0 0
    %168 = vmatprep.subr.bf16.mxu0 0
    %169 = vmatpush1.bf16.msra.mxu0 0
    %170 = vmatprep.subr.bf16.mxu0 0
    %171 = vmatpush1.bf16.msra.mxu0 0
    %172 = vmatprep.mubr.bf16.mxu0 0
    %173 = vmatmul.mubr.bf16.gmra.mrb[0].mxu0 %v138
    %v174 = vpop.f32.mrb[0].mxu0
    %v175 = vadd.f32 0.0, %v174
    %v176 = vpop.f32.mrb[0].mxu0
    %v177 = vpop.f32.mrb[0].mxu0
    %v178 = vpop.f32.mrb[0].mxu0
    %179 = vdwg.mxu0
    %v182 = vunpack.c.l.b16 %v124
    %v183 = vunpack.c.l.b16 %v125
    %v184 = vpack.c.b16 %v183, %v182
    %v187 = vsel %vm136, %v119, 0
    %189 = vmatprep.subr.bf16.mxu0 0
    %190 = vmatpush1.bf16.msra.mxu0 %v184
    %191 = vmatprep.subr.bf16.mxu0 0
    %192 = vmatpush1.bf16.msra.mxu0 0
    %193 = vmatprep.subr.bf16.mxu0 0
    %194 = vmatpush1.bf16.msra.mxu0 0
    %195 = vmatprep.subr.bf16.mxu0 0
    %196 = vmatpush1.bf16.msra.mxu0 0
    %197 = vmatprep.subr.bf16.mxu0 0
    %198 = vmatpush1.bf16.msra.mxu0 0
    %199 = vmatprep.subr.bf16.mxu0 0
    %200 = vmatpush1.bf16.msra.mxu0 0
    %201 = vmatprep.subr.bf16.mxu0 0
    %202 = vmatpush1.bf16.msra.mxu0 0
    %203 = vmatprep.subr.bf16.mxu0 0
    %204 = vmatpush1.bf16.msra.mxu0 0
    %205 = vmatprep.subr.bf16.mxu0 0
    %206 = vmatpush1.bf16.msra.mxu0 0
    %207 = vmatprep.subr.bf16.mxu0 0
    %208 = vmatpush1.bf16.msra.mxu0 0
    %209 = vmatprep.subr.bf16.mxu0 0
    %210 = vmatpush1.bf16.msra.mxu0 0
    %211 = vmatprep.subr.bf16.mxu0 0
    %212 = vmatpush1.bf16.msra.mxu0 0
    %213 = vmatprep.subr.bf16.mxu0 0
    %214 = vmatpush1.bf16.msra.mxu0 0
    %215 = vmatprep.subr.bf16.mxu0 0
    %216 = vmatpush1.bf16.msra.mxu0 0
    %217 = vmatprep.subr.bf16.mxu0 0
    %218 = vmatpush1.bf16.msra.mxu0 0
    %219 = vmatprep.subr.bf16.mxu0 0
    %220 = vmatpush1.bf16.msra.mxu0 0
    %221 = vmatprep.mubr.bf16.mxu0 0
    %222 = vmatmul.mubr.bf16.gmra.mrb[0].mxu0 %v187
    %v223 = vpop.f32.mrb[0].mxu0
    %v224 = vadd.f32 0.0, %v223
    %v225 = vpop.f32.mrb[0].mxu0
    %v226 = vpop.f32.mrb[0].mxu0
    %v227 = vpop.f32.mrb[0].mxu0
    %228 = vdwg.mxu0
    %v231 = vunpack.c.l.b16 %v126
    %v232 = vunpack.c.l.b16 %v127
    %v233 = vpack.c.b16 %v232, %v231
    %v236 = vsel %vm136, %v120, 0
    %238 = vmatprep.subr.bf16.mxu0 0
    %239 = vmatpush1.bf16.msra.mxu0 %v233
    %240 = vmatprep.subr.bf16.mxu0 0
    %241 = vmatpush1.bf16.msra.mxu0 0
    %242 = vmatprep.subr.bf16.mxu0 0
    %243 = vmatpush1.bf16.msra.mxu0 0
    %244 = vmatprep.subr.bf16.mxu0 0
    %245 = vmatpush1.bf16.msra.mxu0 0
    %246 = vmatprep.subr.bf16.mxu0 0
    %247 = vmatpush1.bf16.msra.mxu0 0
    %248 = vmatprep.subr.bf16.mxu0 0
    %249 = vmatpush1.bf16.msra.mxu0 0
    %250 = vmatprep.subr.bf16.mxu0 0
    %251 = vmatpush1.bf16.msra.mxu0 0
    %252 = vmatprep.subr.bf16.mxu0 0
    %253 = vmatpush1.bf16.msra.mxu0 0
    %254 = vmatprep.subr.bf16.mxu0 0
    %255 = vmatpush1.bf16.msra.mxu0 0
    %256 = vmatprep.subr.bf16.mxu0 0
    %257 = vmatpush1.bf16.msra.mxu0 0
    %258 = vmatprep.subr.bf16.mxu0 0
    %259 = vmatpush1.bf16.msra.mxu0 0
    %260 = vmatprep.subr.bf16.mxu0 0
    %261 = vmatpush1.bf16.msra.mxu0 0
    %262 = vmatprep.subr.bf16.mxu0 0
    %263 = vmatpush1.bf16.msra.mxu0 0
    %264 = vmatprep.subr.bf16.mxu0 0
    %265 = vmatpush1.bf16.msra.mxu0 0
    %266 = vmatprep.subr.bf16.mxu0 0
    %267 = vmatpush1.bf16.msra.mxu0 0
    %268 = vmatprep.subr.bf16.mxu0 0
    %269 = vmatpush1.bf16.msra.mxu0 0
    %270 = vmatprep.mubr.bf16.mxu0 0
    %271 = vmatmul.mubr.bf16.gmra.mrb[0].mxu0 %v236
    %v272 = vpop.f32.mrb[0].mxu0
    %v273 = vadd.f32 0.0, %v272
    %v274 = vpop.f32.mrb[0].mxu0
    %v275 = vpop.f32.mrb[0].mxu0
    %v276 = vpop.f32.mrb[0].mxu0
    %277 = vdwg.mxu0
    %v280 = vunpack.c.l.b16 %v128
    %v281 = vunpack.c.l.b16 %v129
    %v282 = vpack.c.b16 %v281, %v280
    %v285 = vsel %vm136, %v121, 0
    %287 = vmatprep.subr.bf16.mxu0 0
    %288 = vmatpush1.bf16.msra.mxu0 %v282
    %289 = vmatprep.subr.bf16.mxu0 0
    %290 = vmatpush1.bf16.msra.mxu0 0
    %291 = vmatprep.subr.bf16.mxu0 0
    %292 = vmatpush1.bf16.msra.mxu0 0
    %293 = vmatprep.subr.bf16.mxu0 0
    %294 = vmatpush1.bf16.msra.mxu0 0
    %295 = vmatprep.subr.bf16.mxu0 0
    %296 = vmatpush1.bf16.msra.mxu0 0
    %297 = vmatprep.subr.bf16.mxu0 0
    %298 = vmatpush1.bf16.msra.mxu0 0
    %299 = vmatprep.subr.bf16.mxu0 0
    %300 = vmatpush1.bf16.msra.mxu0 0
    %301 = vmatprep.subr.bf16.mxu0 0
    %302 = vmatpush1.bf16.msra.mxu0 0
    %303 = vmatprep.subr.bf16.mxu0 0
    %304 = vmatpush1.bf16.msra.mxu0 0
    %305 = vmatprep.subr.bf16.mxu0 0
    %306 = vmatpush1.bf16.msra.mxu0 0
    %307 = vmatprep.subr.bf16.mxu0 0
    %308 = vmatpush1.bf16.msra.mxu0 0
    %309 = vmatprep.subr.bf16.mxu0 0
    %310 = vmatpush1.bf16.msra.mxu0 0
    %311 = vmatprep.subr.bf16.mxu0 0
    %312 = vmatpush1.bf16.msra.mxu0 0
    %313 = vmatprep.subr.bf16.mxu0 0
    %314 = vmatpush1.bf16.msra.mxu0 0
    %315 = vmatprep.subr.bf16.mxu0 0
    %316 = vmatpush1.bf16.msra.mxu0 0
    %317 = vmatprep.subr.bf16.mxu0 0
    %318 = vmatpush1.bf16.msra.mxu0 0
    %319 = vmatprep.mubr.bf16.mxu0 0
    %320 = vmatmul.mubr.bf16.gmra.mrb[0].mxu0 %v285
    %v321 = vpop.f32.mrb[0].mxu0
    %v322 = vadd.f32 0.0, %v321
    %v323 = vpop.f32.mrb[0].mxu0
    %v324 = vpop.f32.mrb[0].mxu0
    %v325 = vpop.f32.mrb[0].mxu0
    %326 = vdwg.mxu0
    %v327 = vld [vmem:[%s2] sm:$0xff]
    %v328 = vld [vmem:[%s2 + $0x8] sm:$0xff]
    %v329 = vld [vmem:[%s2 + $0x10] sm:$0xff]
    %v330 = vld [vmem:[%s2 + $0x18] sm:$0xff]
    %vm331 = vcmp.ne.s32.totalorder %v327, 0
    %vm332 = vcmp.ne.s32.totalorder %v328, 0
    %vm333 = vcmp.ne.s32.totalorder %v329, 0
    %vm334 = vcmp.ne.s32.totalorder %v330, 0
    %v335 = vsel %vm331, 1, 0
    %v336 = vsel %vm332, 1, 0
    %v337 = vsel %vm333, 1, 0
    %v338 = vsel %vm334, 1, 0
    %339 = vset.pattern.permute.xlu0 0
    %340 = vperm.xlu0 %339, %v335
    %v341 = vpop.permute.xlu0 %340
    %342 = vset.pattern.permute.xlu0 0
    %343 = vperm.xlu0 %342, %v336
    %v344 = vpop.permute.xlu0 %343
    %345 = vset.pattern.permute.xlu0 0
    %346 = vperm.xlu0 %345, %v337
    %v347 = vpop.permute.xlu0 %346
    %348 = vset.pattern.permute.xlu0 0
    %349 = vperm.xlu0 %348, %v338
    %v350 = vpop.permute.xlu0 %349
    %vm351 = vcmp.eq.s32.totalorder %v341, 1
    %vm352 = vcmp.eq.s32.totalorder %v344, 1
    %vm353 = vcmp.eq.s32.totalorder %v347, 1
    %vm354 = vcmp.eq.s32.totalorder %v350, 1
    %v355 = vsel %vm351, -inf, %v175
    %v356 = vsel %vm352, -inf, %v224
    %v357 = vsel %vm353, -inf, %v273
    %v358 = vsel %vm354, -inf, %v322
    %v359 = vmul.f32 %v355, 1.442695
    %v360 = vpow.pop %v359
    %v361 = vmul.f32 %v356, 1.442695
    %v362 = vpow.pop %v361
    %v363 = vmul.f32 %v357, 1.442695
    %v364 = vpow.pop %v363
    %v365 = vmul.f32 %v358, 1.442695
    %v366 = vpow.pop %v365
    %v367 = vrot.slane %v360, 4
    %v368 = vadd.f32 %v360, %v367
    %v369 = vrot.slane %v368, 2
    %v370 = vadd.f32 %v368, %v369
    %v371 = vrot.slane %v370, 1
    %v372 = vadd.f32 %v370, %v371
    %v373 = vrot.slane %v362, 4
    %v374 = vadd.f32 %v362, %v373
    %v375 = vrot.slane %v374, 2
    %v376 = vadd.f32 %v374, %v375
    %v377 = vrot.slane %v376, 1
    %v378 = vadd.f32 %v376, %v377
    %v379 = vrot.slane %v364, 4
    %v380 = vadd.f32 %v364, %v379
    %v381 = vrot.slane %v380, 2
    %v382 = vadd.f32 %v380, %v381
    %v383 = vrot.slane %v382, 1
    %v384 = vadd.f32 %v382, %v383
    %v385 = vrot.slane %v366, 4
    %v386 = vadd.f32 %v366, %v385
    %v387 = vrot.slane %v386, 2
    %v388 = vadd.f32 %v386, %v387
    %v389 = vrot.slane %v388, 1
    %v390 = vadd.f32 %v388, %v389
    %v391 = vrcp.pop %v372
    %v392 = vrcp.pop %v378
    %v393 = vrcp.pop %v384
    %v394 = vrcp.pop %v390
    %v395 = vmul.f32 %v360, %v391
    %v396 = vmul.f32 %v362, %v392
    %v397 = vmul.f32 %v364, %v393
    %v398 = vmul.f32 %v366, %v394
    %399 = vst [vmem:[#allocation4] sm:$0xff] %v395
    %400 = vst [vmem:[#allocation4 + $0x8] sm:$0xff] %v396
    %401 = vst [vmem:[#allocation4 + $0x10] sm:$0xff] %v397
    %402 = vst [vmem:[#allocation4 + $0x18] sm:$0xff] %v398
    %v403 = vpack.c.bf16 %v395, %v395
    %v404 = vpack.c.bf16 %v396, %v396
    %v405 = vpack.c.bf16 %v397, %v397
    %v406 = vpack.c.bf16 %v398, %v398
    %407 = vxpose.xlu0.c.b16.start [1/8] %v118, 128
    %408 = vxpose.xlu0.c.b16.cont [2/8] 0, 128
    %409 = vxpose.xlu0.c.b16.cont [3/8] 0, 128
    %410 = vxpose.xlu0.c.b16.cont [4/8] 0, 128
    %411 = vxpose.xlu0.c.b16.cont [5/8] 0, 128
    %412 = vxpose.xlu0.c.b16.cont [6/8] 0, 128
    %413 = vxpose.xlu0.c.b16.cont [7/8] 0, 128
    %414 = vxpose.xlu0.c.b16.end [8/8] 0, 128
    %v415 = vpop.trf.xlu0
    %v416 = vpop.trf.xlu0
    %v417 = vpop.trf.xlu0
    %v418 = vpop.trf.xlu0
    %v419 = vpop.trf.xlu0
    %v420 = vpop.trf.xlu0
    %v421 = vpop.trf.xlu0
    %v422 = vpop.trf.xlu0
    %vm423 = vcmask 64512
    %v425 = vsel %vm423, %v415, 0
    %vm427 = vcmask 1043456
    %v429 = vsel %vm427, %v403, 0
    %431 = vmatprep.subr.bf16.mxu0 0
    %432 = vmatpush1.bf16.msra.mxu0 %v429
    %433 = vmatprep.subr.bf16.mxu0 0
    %434 = vmatpush1.bf16.msra.mxu0 0
    %435 = vmatprep.subr.bf16.mxu0 0
    %436 = vmatpush1.bf16.msra.mxu0 0
    %437 = vmatprep.subr.bf16.mxu0 0
    %438 = vmatpush1.bf16.msra.mxu0 0
    %439 = vmatprep.subr.bf16.mxu0 0
    %440 = vmatpush1.bf16.msra.mxu0 0
    %441 = vmatprep.subr.bf16.mxu0 0
    %442 = vmatpush1.bf16.msra.mxu0 0
    %443 = vmatprep.subr.bf16.mxu0 0
    %444 = vmatpush1.bf16.msra.mxu0 0
    %445 = vmatprep.subr.bf16.mxu0 0
    %446 = vmatpush1.bf16.msra.mxu0 0
    %447 = vmatprep.subr.bf16.mxu0 0
    %448 = vmatpush1.bf16.msra.mxu0 0
    %449 = vmatprep.subr.bf16.mxu0 0
    %450 = vmatpush1.bf16.msra.mxu0 0
    %451 = vmatprep.subr.bf16.mxu0 0
    %452 = vmatpush1.bf16.msra.mxu0 0
    %453 = vmatprep.subr.bf16.mxu0 0
    %454 = vmatpush1.bf16.msra.mxu0 0
    %455 = vmatprep.subr.bf16.mxu0 0
    %456 = vmatpush1.bf16.msra.mxu0 0
    %457 = vmatprep.subr.bf16.mxu0 0
    %458 = vmatpush1.bf16.msra.mxu0 0
    %459 = vmatprep.subr.bf16.mxu0 0
    %460 = vmatpush1.bf16.msra.mxu0 0
    %461 = vmatprep.subr.bf16.mxu0 0
    %462 = vmatpush1.bf16.msra.mxu0 0
    %463 = vmatprep.mubr.bf16.mxu0 0
    %464 = vmatmul.mubr.bf16.gmra.mrb[0].mxu0 %v425
    %v465 = vpop.f32.mrb[0].mxu0
    %v466 = vadd.f32 0.0, %v465
    %v467 = vpop.f32.mrb[0].mxu0
    %v468 = vpop.f32.mrb[0].mxu0
    %v469 = vadd.f32 0.0, %v468
    %v470 = vpop.f32.mrb[0].mxu0
    %471 = vdwg.mxu0
    %472 = vxpose.xlu0.c.b16.start [1/8] %v119, 128
    %473 = vxpose.xlu0.c.b16.cont [2/8] 0, 128
    %474 = vxpose.xlu0.c.b16.cont [3/8] 0, 128
    %475 = vxpose.xlu0.c.b16.cont [4/8] 0, 128
    %476 = vxpose.xlu0.c.b16.cont [5/8] 0, 128
    %477 = vxpose.xlu0.c.b16.cont [6/8] 0, 128
    %478 = vxpose.xlu0.c.b16.cont [7/8] 0, 128
    %479 = vxpose.xlu0.c.b16.end [8/8] 0, 128
    %v480 = vpop.trf.xlu0
    %v481 = vpop.trf.xlu0
    %v482 = vpop.trf.xlu0
    %v483 = vpop.trf.xlu0
    %v484 = vpop.trf.xlu0
    %v485 = vpop.trf.xlu0
    %v486 = vpop.trf.xlu0
    %v487 = vpop.trf.xlu0
    %v489 = vsel %vm423, %v480, 0
    %v492 = vsel %vm427, %v404, 0
    %494 = vmatprep.subr.bf16.mxu0 0
    %495 = vmatpush1.bf16.msra.mxu0 %v492
    %496 = vmatprep.subr.bf16.mxu0 0
    %497 = vmatpush1.bf16.msra.mxu0 0
    %498 = vmatprep.subr.bf16.mxu0 0
    %499 = vmatpush1.bf16.msra.mxu0 0
    %500 = vmatprep.subr.bf16.mxu0 0
    %501 = vmatpush1.bf16.msra.mxu0 0
    %502 = vmatprep.subr.bf16.mxu0 0
    %503 = vmatpush1.bf16.msra.mxu0 0
    %504 = vmatprep.subr.bf16.mxu0 0
    %505 = vmatpush1.bf16.msra.mxu0 0
    %506 = vmatprep.subr.bf16.mxu0 0
    %507 = vmatpush1.bf16.msra.mxu0 0
    %508 = vmatprep.subr.bf16.mxu0 0
    %509 = vmatpush1.bf16.msra.mxu0 0
    %510 = vmatprep.subr.bf16.mxu0 0
    %511 = vmatpush1.bf16.msra.mxu0 0
    %512 = vmatprep.subr.bf16.mxu0 0
    %513 = vmatpush1.bf16.msra.mxu0 0
    %514 = vmatprep.subr.bf16.mxu0 0
    %515 = vmatpush1.bf16.msra.mxu0 0
    %516 = vmatprep.subr.bf16.mxu0 0
    %517 = vmatpush1.bf16.msra.mxu0 0
    %518 = vmatprep.subr.bf16.mxu0 0
    %519 = vmatpush1.bf16.msra.mxu0 0
    %520 = vmatprep.subr.bf16.mxu0 0
    %521 = vmatpush1.bf16.msra.mxu0 0
    %522 = vmatprep.subr.bf16.mxu0 0
    %523 = vmatpush1.bf16.msra.mxu0 0
    %524 = vmatprep.subr.bf16.mxu0 0
    %525 = vmatpush1.bf16.msra.mxu0 0
    %526 = vmatprep.mubr.bf16.mxu0 0
    %527 = vmatmul.mubr.bf16.gmra.mrb[0].mxu0 %v489
    %v528 = vpop.f32.mrb[0].mxu0
    %v529 = vadd.f32 0.0, %v528
    %v530 = vpop.f32.mrb[0].mxu0
    %v531 = vpop.f32.mrb[0].mxu0
    %v532 = vadd.f32 0.0, %v531
    %v533 = vpop.f32.mrb[0].mxu0
    %534 = vdwg.mxu0
    %535 = vxpose.xlu0.c.b16.start [1/8] %v120, 128
    %536 = vxpose.xlu0.c.b16.cont [2/8] 0, 128
    %537 = vxpose.xlu0.c.b16.cont [3/8] 0, 128
    %538 = vxpose.xlu0.c.b16.cont [4/8] 0, 128
    %539 = vxpose.xlu0.c.b16.cont [5/8] 0, 128
    %540 = vxpose.xlu0.c.b16.cont [6/8] 0, 128
    %541 = vxpose.xlu0.c.b16.cont [7/8] 0, 128
    %542 = vxpose.xlu0.c.b16.end [8/8] 0, 128
    %v543 = vpop.trf.xlu0
    %v544 = vpop.trf.xlu0
    %v545 = vpop.trf.xlu0
    %v546 = vpop.trf.xlu0
    %v547 = vpop.trf.xlu0
    %v548 = vpop.trf.xlu0
    %v549 = vpop.trf.xlu0
    %v550 = vpop.trf.xlu0
    %v552 = vsel %vm423, %v543, 0
    %v555 = vsel %vm427, %v405, 0
    %557 = vmatprep.subr.bf16.mxu0 0
    %558 = vmatpush1.bf16.msra.mxu0 %v555
    %559 = vmatprep.subr.bf16.mxu0 0
    %560 = vmatpush1.bf16.msra.mxu0 0
    %561 = vmatprep.subr.bf16.mxu0 0
    %562 = vmatpush1.bf16.msra.mxu0 0
    %563 = vmatprep.subr.bf16.mxu0 0
    %564 = vmatpush1.bf16.msra.mxu0 0
    %565 = vmatprep.subr.bf16.mxu0 0
    %566 = vmatpush1.bf16.msra.mxu0 0
    %567 = vmatprep.subr.bf16.mxu0 0
    %568 = vmatpush1.bf16.msra.mxu0 0
    %569 = vmatprep.subr.bf16.mxu0 0
    %570 = vmatpush1.bf16.msra.mxu0 0
    %571 = vmatprep.subr.bf16.mxu0 0
    %572 = vmatpush1.bf16.msra.mxu0 0
    %573 = vmatprep.subr.bf16.mxu0 0
    %574 = vmatpush1.bf16.msra.mxu0 0
    %575 = vmatprep.subr.bf16.mxu0 0
    %576 = vmatpush1.bf16.msra.mxu0 0
    %577 = vmatprep.subr.bf16.mxu0 0
    %578 = vmatpush1.bf16.msra.mxu0 0
    %579 = vmatprep.subr.bf16.mxu0 0
    %580 = vmatpush1.bf16.msra.mxu0 0
    %581 = vmatprep.subr.bf16.mxu0 0
    %582 = vmatpush1.bf16.msra.mxu0 0
    %583 = vmatprep.subr.bf16.mxu0 0
    %584 = vmatpush1.bf16.msra.mxu0 0
    %585 = vmatprep.subr.bf16.mxu0 0
    %586 = vmatpush1.bf16.msra.mxu0 0
    %587 = vmatprep.subr.bf16.mxu0 0
    %588 = vmatpush1.bf16.msra.mxu0 0
    %589 = vmatprep.mubr.bf16.mxu0 0
    %590 = vmatmul.mubr.bf16.gmra.mrb[0].mxu0 %v552
    %v591 = vpop.f32.mrb[0].mxu0
    %v592 = vadd.f32 0.0, %v591
    %v593 = vpop.f32.mrb[0].mxu0
    %v594 = vpop.f32.mrb[0].mxu0
    %v595 = vadd.f32 0.0, %v594
    %v596 = vpop.f32.mrb[0].mxu0
    %597 = vdwg.mxu0
    %598 = vxpose.xlu0.c.b16.start [1/8] %v121, 128
    %599 = vxpose.xlu0.c.b16.cont [2/8] 0, 128
    %600 = vxpose.xlu0.c.b16.cont [3/8] 0, 128
    %601 = vxpose.xlu0.c.b16.cont [4/8] 0, 128
    %602 = vxpose.xlu0.c.b16.cont [5/8] 0, 128
    %603 = vxpose.xlu0.c.b16.cont [6/8] 0, 128
    %604 = vxpose.xlu0.c.b16.cont [7/8] 0, 128
    %605 = vxpose.xlu0.c.b16.end [8/8] 0, 128
    %v606 = vpop.trf.xlu0
    %v607 = vpop.trf.xlu0
    %v608 = vpop.trf.xlu0
    %v609 = vpop.trf.xlu0
    %v610 = vpop.trf.xlu0
    %v611 = vpop.trf.xlu0
    %v612 = vpop.trf.xlu0
    %v613 = vpop.trf.xlu0
    %v615 = vsel %vm423, %v606, 0
    %v618 = vsel %vm427, %v406, 0
    %620 = vmatprep.subr.bf16.mxu0 0
    %621 = vmatpush1.bf16.msra.mxu0 %v618
    %622 = vmatprep.subr.bf16.mxu0 0
    %623 = vmatpush1.bf16.msra.mxu0 0
    %624 = vmatprep.subr.bf16.mxu0 0
    %625 = vmatpush1.bf16.msra.mxu0 0
    %626 = vmatprep.subr.bf16.mxu0 0
    %627 = vmatpush1.bf16.msra.mxu0 0
    %628 = vmatprep.subr.bf16.mxu0 0
    %629 = vmatpush1.bf16.msra.mxu0 0
    %630 = vmatprep.subr.bf16.mxu0 0
    %631 = vmatpush1.bf16.msra.mxu0 0
    %632 = vmatprep.subr.bf16.mxu0 0
    %633 = vmatpush1.bf16.msra.mxu0 0
    %634 = vmatprep.subr.bf16.mxu0 0
    %635 = vmatpush1.bf16.msra.mxu0 0
    %636 = vmatprep.subr.bf16.mxu0 0
    %637 = vmatpush1.bf16.msra.mxu0 0
    %638 = vmatprep.subr.bf16.mxu0 0
    %639 = vmatpush1.bf16.msra.mxu0 0
    %640 = vmatprep.subr.bf16.mxu0 0
    %641 = vmatpush1.bf16.msra.mxu0 0
    %642 = vmatprep.subr.bf16.mxu0 0
    %643 = vmatpush1.bf16.msra.mxu0 0
    %644 = vmatprep.subr.bf16.mxu0 0
    %645 = vmatpush1.bf16.msra.mxu0 0
    %646 = vmatprep.subr.bf16.mxu0 0
    %647 = vmatpush1.bf16.msra.mxu0 0
    %648 = vmatprep.subr.bf16.mxu0 0
    %649 = vmatpush1.bf16.msra.mxu0 0
    %650 = vmatprep.subr.bf16.mxu0 0
    %651 = vmatpush1.bf16.msra.mxu0 0
    %652 = vmatprep.mubr.bf16.mxu0 0
    %653 = vmatmul.mubr.bf16.gmra.mrb[0].mxu0 %v615
    %v654 = vpop.f32.mrb[0].mxu0
    %v655 = vadd.f32 0.0, %v654
    %v656 = vpop.f32.mrb[0].mxu0
    %v657 = vpop.f32.mrb[0].mxu0
    %v658 = vadd.f32 0.0, %v657
    %v659 = vpop.f32.mrb[0].mxu0
    %660 = vdwg.mxu0
    %661 = vst [vmem:[#allocation2] sm:$0xff] %v466
    %662 = vst [vmem:[#allocation2 + $0x8] sm:$0xff] %v469
    %663 = vst [vmem:[#allocation2 + $0x10] sm:$0xff] %v529
    %664 = vst [vmem:[#allocation2 + $0x18] sm:$0xff] %v532
    %665 = vst [vmem:[#allocation2 + $0x20] sm:$0xff] %v592
    %666 = vst [vmem:[#allocation2 + $0x28] sm:$0xff] %v595
    %667 = vst [vmem:[#allocation2 + $0x30] sm:$0xff] %v655
    %668 = vst [vmem:[#allocation2 + $0x38] sm:$0xff] %v658
    // Predicated region
    $region22: #{tpu_custom_call.1} parent=1 // pred_check
      _
    $region23: #{tpu_custom_call.1} parent=1 // pred_check_branch
      %670 = sbr.rel (0) target = $region25
    $region24: #{tpu_custom_call.1} parent=1 // pred_region
      %s672 = ssub.s32 1024, 1024
      %673 = vsyncadd [#allocation3], %s672
      %s674 = sshll.u32 [#allocation2], 4
      %s675 = int_to_ptr.vmem [resolvable:$true] %s674
      %680 = dma.vmem_to_hbm [thread:$0]  %s675, 1024, %s5, [#allocation3], 128, 128, 8
    $region25: #{tpu_custom_call.1} parent=1 // pred_fallthru
      _
    // Predicated region
    $region26: #{tpu_custom_call.1} parent=1 // pred_check
      _
    $region27: #{tpu_custom_call.1} parent=1 // pred_check_branch
      %682 = sbr.rel (0) target = $region29
    $region28: #{tpu_custom_call.1} parent=1 // pred_region
      %s684 = ssub.s32 512, 512
      %685 = vsyncadd [#allocation5], %s684
      %s686 = sshll.u32 [#allocation4], 4
      %s687 = int_to_ptr.vmem [resolvable:$true] %s686
      %692 = dma.vmem_to_hbm [thread:$0]  %s687, 512, %s6, [#allocation5], 128, 128, 8
    $region29: #{tpu_custom_call.1} parent=1 // pred_fallthru
      _
    // Predicated region
    $region30: #{tpu_custom_call.1} parent=1 // pred_check
      _
    $region31: #{tpu_custom_call.1} parent=1 // pred_check_branch
      %694 = sbr.rel (0) target = $region33
    $region32: #{tpu_custom_call.1} parent=1 // pred_region
      %695 = dma.done [#allocation3], 1024
    $region33: #{tpu_custom_call.1} parent=1 // pred_fallthru
      _
    // Predicated region
    $region34: #{tpu_custom_call.1} parent=1 // pred_check
      _
    $region35: #{tpu_custom_call.1} parent=1 // pred_check_branch
      %697 = sbr.rel (0) target = $region37
    $region36: #{tpu_custom_call.1} parent=1 // pred_region
      %698 = dma.done [#allocation5], 512
    $region37: #{tpu_custom_call.1} parent=1 // pred_fallthru
      _
    %699 = vsyncpa [#allocation3], 1
    %700 = vsyncpa [#allocation5], 1

</llo_original>
